<compile_context>
chip_gen: v7x
topology: tpu7x:2x2x1
jax: 0.10.0
libtpu: 0.0.40
codegen_flags: <defaults>
</compile_context>

<pallas_src>
import jax
import jax.numpy as jnp
from jax.experimental import pallas as pl
from jax.experimental.pallas import tpu as pltpu


def _round_up(x, m):
    return (x + m - 1) // m * m


# ----------------------------------------------------------------------------- kernel
def lstm_predictor_kernel(x_ref, aidx_ref, wemb_ref, w0_ref, b0_ref,
                          w1_ref, b1_ref, wout_ref, bout_ref, o_ref):
    TB = x_ref.shape[0]
    na2 = wemb_ref.shape[0]          # 2 * num_actions
    na = na2 // 2
    Hp = w1_ref.shape[0]             # hidden size padded to 128

    # --- fused action-embedding "gather": one-hot @ (E @ W_a) -----------------
    a_idx = aidx_ref[...]                                            # [TB, 2] i32
    lane = jax.lax.broadcasted_iota(jnp.int32, (TB, na2), 1)
    tgt = jnp.where(lane < na, a_idx[:, 0:1], a_idx[:, 1:2] + na)
    onehot = (lane == tgt).astype(jnp.float32)                       # [TB, 2*na]

    def lstm_cell(gates):
        # gates: [TB, 3*Hp] laid out as [i | g | o], each block Hp-wide (pad -> 0)
        i_g = jax.nn.sigmoid(gates[:, 0 * Hp:1 * Hp])
        g_g = jnp.tanh(gates[:, 1 * Hp:2 * Hp])
        o_g = jax.nn.sigmoid(gates[:, 2 * Hp:3 * Hp])
        c = i_g * g_g                  # forget gate dead (c0 == 0)
        return o_g * jnp.tanh(c)       # padded columns stay exactly 0

    # --- layer 1 ---------------------------------------------------------------
    gates0 = (jnp.dot(x_ref[...], w0_ref[...], preferred_element_type=jnp.float32)
              + jnp.dot(onehot, wemb_ref[...], preferred_element_type=jnp.float32)
              + b0_ref[...])
    h1 = lstm_cell(gates0)

    # --- layer 2 ---------------------------------------------------------------
    gates1 = jnp.dot(h1, w1_ref[...], preferred_element_type=jnp.float32) + b1_ref[...]
    h2 = lstm_cell(gates1)

    # --- output projection (lane-dense 128-wide store) --------------------------
    o_ref[...] = (jnp.dot(h2, wout_ref[...], preferred_element_type=jnp.float32)
                  + bout_ref[...])


# ----------------------------------------------------------------------------- wrapper
def _prepare_weights(params, input_dim, output_dim, hidden_size, action_embed_dim):
    """Fold biases, drop forget gate, fold embedding table, pad to 128 lanes."""
    H = hidden_size
    A = action_embed_dim
    Hp = _round_up(H, 128)
    Kp = _round_up(input_dim, 128)
    OutP = _round_up(output_dim, 128)

    def drop_forget_T(w):            # [4H, D] -> [D, 3H], gates (i, g, o)
        wi, _wf, wg, wo = jnp.split(w, 4, axis=0)
        return jnp.concatenate([wi, wg, wo], axis=0).T

    def drop_forget_bias(b_ih, b_hh):
        b = b_ih + b_hh
        bi, _bf, bg, bo = jnp.split(b, 4)
        return jnp.concatenate([bi, bg, bo])      # [3H]

    def pad_gate_cols(w3h):          # [D, 3H] -> [D, 3*Hp]; each gate block Hp-wide
        D = w3h.shape[0]
        out = jnp.zeros((D, 3 * Hp), jnp.float32)
        for g in range(3):
            out = out.at[:, g * Hp:g * Hp + H].set(w3h[:, g * H:(g + 1) * H])
        return out

    def pad_gate_bias(b3h):          # [3H] -> [1, 3*Hp]
        out = jnp.zeros((3 * Hp,), jnp.float32)
        for g in range(3):
            out = out.at[g * Hp:g * Hp + H].set(b3h[g * H:(g + 1) * H])
        return out[None, :]

    # layer 0: split the input weight into state / action0 / action1 parts and
    # fold the embedding table into the action parts:  (onehot @ E) @ W == onehot @ (E @ W)
    w0_full = drop_forget_T(params["weight_ih_l0"])              # [input_dim + 2A, 3H]
    w_state = w0_full[:input_dim]
    w_a0 = w0_full[input_dim:input_dim + A]
    w_a1 = w0_full[input_dim + A:input_dim + 2 * A]
    E = params["action_embedding"]                               # [num_actions, A]
    wemb = jnp.concatenate([E @ w_a0, E @ w_a1], axis=0)         # [2*num_actions, 3H]

    w0 = jnp.zeros((Kp, 3 * Hp), jnp.float32).at[:input_dim].set(pad_gate_cols(w_state))
    wemb_p = pad_gate_cols(wemb)
    b0 = pad_gate_bias(drop_forget_bias(params["bias_ih_l0"], params["bias_hh_l0"]))

    w1_full = drop_forget_T(params["weight_ih_l1"])              # [H, 3H]
    w1 = jnp.zeros((Hp, 3 * Hp), jnp.float32).at[:H].set(pad_gate_cols(w1_full))
    b1 = pad_gate_bias(drop_forget_bias(params["bias_ih_l1"], params["bias_hh_l1"]))

    wout = jnp.zeros((Hp, OutP), jnp.float32).at[:H, :output_dim].set(params["output_proj_w"].T)
    bout = jnp.zeros((1, OutP), jnp.float32).at[0, :output_dim].set(params["output_proj_b"])

    return dict(w0=w0, wemb=wemb_p, b0=b0, w1=w1, b1=b1, wout=wout, bout=bout,
                Kp=Kp, Hp=Hp, OutP=OutP)


def lstm_predictor_forward(state, action_indices, params, *, batch_tile=512):
    """state: [B, input_dim] f32, action_indices: [B, 2] int32 -> [B, output_dim]."""
    B, input_dim = state.shape
    output_dim = params["output_proj_w"].shape[0]
    hidden_size = params["weight_ih_l1"].shape[1]
    action_embed_dim = params["action_embedding"].shape[1]
    num_actions = params["action_embedding"].shape[0]

    prep = _prepare_weights(params, input_dim, output_dim, hidden_size, action_embed_dim)
    Kp, Hp, OutP = prep["Kp"], prep["Hp"], prep["OutP"]

    # Batch tiling: multiple of 8 sublanes; tile at `batch_tile` rows for large B.
    if B <= batch_tile:
        TB = _round_up(B, 8)
        Bp = TB
    else:
        TB = batch_tile
        Bp = _round_up(B, TB)

    # Lane-dense, zero-padded inputs.
    x = jnp.zeros((Bp, Kp), jnp.float32).at[:B, :input_dim].set(state)
    aidx = jnp.zeros((Bp, 2), jnp.int32).at[:B].set(action_indices.astype(jnp.int32))

    grid = (Bp // TB,)
    rep = lambda i: (0, 0)   # weights resident in VMEM across the batch grid

    flops = 2 * Bp * (Kp * 3 * Hp + 2 * num_actions * 3 * Hp + Hp * 3 * Hp + Hp * OutP)
    bytes_accessed = 4 * (Bp * Kp + Bp * OutP
                          + Kp * 3 * Hp + 2 * num_actions * 3 * Hp
                          + Hp * 3 * Hp + Hp * OutP) + 4 * Bp * 2

    out_padded = pl.pallas_call(
        lstm_predictor_kernel,
        out_shape=jax.ShapeDtypeStruct((Bp, OutP), jnp.float32),
        grid_spec=pltpu.PrefetchScalarGridSpec(
            num_scalar_prefetch=0,
            grid=grid,
            in_specs=[
                pl.BlockSpec((TB, Kp), lambda i: (i, 0)),               # state (padded)
                pl.BlockSpec((TB, 2), lambda i: (i, 0)),                # action indices
                pl.BlockSpec((2 * num_actions, 3 * Hp), rep),           # folded E @ W_a
                pl.BlockSpec((Kp, 3 * Hp), rep),                        # W_ih_l0 (state part)
                pl.BlockSpec((1, 3 * Hp), rep),                         # b0
                pl.BlockSpec((Hp, 3 * Hp), rep),                        # W_ih_l1
                pl.BlockSpec((1, 3 * Hp), rep),                         # b1
                pl.BlockSpec((Hp, OutP), rep),                          # W_out
                pl.BlockSpec((1, OutP), rep),                           # b_out
            ],
            out_specs=pl.BlockSpec((TB, OutP), lambda i: (i, 0)),
        ),
        compiler_params=pltpu.CompilerParams(
            dimension_semantics=("parallel",)),
        cost_estimate=pl.CostEstimate(
            flops=flops,
            transcendentals=8 * Bp * Hp,
            bytes_accessed=bytes_accessed),
    )(x, aidx, prep["wemb"], prep["w0"], prep["b0"], prep["w1"], prep["b1"],
      prep["wout"], prep["bout"])

    return out_padded[:B, :output_dim]


# ----------------------------------------------------------------------------- params / reference
def init_params(key, input_dim, output_dim, num_actions, action_embed_dim, hidden_size):
    ks = jax.random.split(key, 10)
    combined_dim = input_dim + 2 * action_embed_dim
    H = hidden_size
    s = 1.0 / jnp.sqrt(jnp.float32(H))

    def u(k, shape):
        return jax.random.uniform(k, shape, jnp.float32, -s, s)

    return {
        "action_embedding": jax.random.normal(ks[0], (num_actions, action_embed_dim), jnp.float32),
        "weight_ih_l0": u(ks[1], (4 * H, combined_dim)),
        "bias_ih_l0":   u(ks[2], (4 * H,)),
        "bias_hh_l0":   u(ks[3], (4 * H,)),
        "weight_ih_l1": u(ks[4], (4 * H, H)),
        "bias_ih_l1":   u(ks[5], (4 * H,)),
        "bias_hh_l1":   u(ks[6], (4 * H,)),
        "output_proj_w": u(ks[7], (output_dim, H)),
        "output_proj_b": u(ks[8], (output_dim,)),
    }


def reference_forward(state, action_indices, params):
    """Pure-JAX reference of the full LSTMPredictor math (seq_len=1, h0=c0=0)."""
    emb = params["action_embedding"]
    a0 = jnp.take(emb, action_indices[:, 0], axis=0)
    a1 = jnp.take(emb, action_indices[:, 1], axis=0)
    x = jnp.concatenate([state, a0, a1], axis=1)

    def cell(x, w_ih, b_ih, b_hh):
        g = x @ w_ih.T + b_ih + b_hh
        i, f, gg, o = jnp.split(g, 4, axis=1)
        c = jax.nn.sigmoid(i) * jnp.tanh(gg)          # f * c0 == 0
        return jax.nn.sigmoid(o) * jnp.tanh(c)

    h1 = cell(x, params["weight_ih_l0"], params["bias_ih_l0"], params["bias_hh_l0"])
    h2 = cell(h1, params["weight_ih_l1"], params["bias_ih_l1"], params["bias_hh_l1"])
    return h2 @ params["output_proj_w"].T + params["output_proj_b"]


if __name__ == "__main__":
    B = 2
    input_dim = 32
    output_dim = 32
    num_actions = 6
    action_embed_dim = 4
    hidden_size = 32

    key = jax.random.PRNGKey(0)
    k_state, k_act, k_params = jax.random.split(key, 3)

    state = jax.random.normal(k_state, (B, input_dim), jnp.float32)
    action_indices = jax.random.randint(k_act, (B, 2), 0, num_actions, jnp.int32)
    params = init_params(k_params, input_dim, output_dim, num_actions,
                         action_embed_dim, hidden_size)

    out = lstm_predictor_forward(state, action_indices, params)
    out = jax.block_until_ready(out)

    ref = reference_forward(state, action_indices, params)
    assert out.shape == (B, output_dim)
    assert jnp.allclose(out, ref, atol=1e-4, rtol=1e-4), float(jnp.max(jnp.abs(out - ref)))

    print("KERNEL_OK")
</pallas_src>

<mosaic_0001>
module attributes {stable_mosaic.version = 11 : i64} {
  func.func @lstm_predictor_kernel(%arg0: i32, %arg1: memref<8x128xf32, #tpu.memory_space<vmem>>, %arg2: memref<8x2xi32, #tpu.memory_space<vmem>>, %arg3: memref<12x384xf32, #tpu.memory_space<vmem>>, %arg4: memref<128x384xf32, #tpu.memory_space<vmem>>, %arg5: memref<1x384xf32, #tpu.memory_space<vmem>>, %arg6: memref<128x384xf32, #tpu.memory_space<vmem>>, %arg7: memref<1x384xf32, #tpu.memory_space<vmem>>, %arg8: memref<128x128xf32, #tpu.memory_space<vmem>>, %arg9: memref<1x128xf32, #tpu.memory_space<vmem>>, %arg10: memref<8x128xf32, #tpu.memory_space<vmem>>) attributes {dimension_semantics = [#tpu.dimension_semantics<parallel>], iteration_bounds = array<i64: 1>, scalar_prefetch = 0 : i64, scratch_operands = 0 : i64, tpu.core_type = #tpu.core_type<tc>, window_params = [{transform_indices = @transform_0, window_bounds = array<i64: 8, 128>}, {transform_indices = @transform_1, window_bounds = array<i64: 8, 2>}, {pipeline_mode = #tpu.pipeline_mode<synchronous>, transform_indices = @transform_2, window_bounds = array<i64: 12, 384>}, {pipeline_mode = #tpu.pipeline_mode<synchronous>, transform_indices = @transform_3, window_bounds = array<i64: 128, 384>}, {pipeline_mode = #tpu.pipeline_mode<synchronous>, transform_indices = @transform_4, window_bounds = array<i64: 1, 384>}, {pipeline_mode = #tpu.pipeline_mode<synchronous>, transform_indices = @transform_5, window_bounds = array<i64: 128, 384>}, {pipeline_mode = #tpu.pipeline_mode<synchronous>, transform_indices = @transform_6, window_bounds = array<i64: 1, 384>}, {pipeline_mode = #tpu.pipeline_mode<synchronous>, transform_indices = @transform_7, window_bounds = array<i64: 128, 128>}, {pipeline_mode = #tpu.pipeline_mode<synchronous>, transform_indices = @transform_8, window_bounds = array<i64: 1, 128>}, {transform_indices = @transform_9, window_bounds = array<i64: 8, 128>}]} {
    %c0 = arith.constant 0 : index
    %c0_0 = arith.constant 0 : index
    %0 = vector.load %arg2[%c0, %c0_0] : memref<8x2xi32, #tpu.memory_space<vmem>>, vector<8x2xi32>
    %1 = tpu.iota {dimensions = array<i32: 1>} : vector<8x12xi32>
    %c6_i32 = arith.constant 6 : i32
    %2 = vector.broadcast %c6_i32 : i32 to vector<8x12xi32>
    %3 = arith.cmpi slt, %1, %2 : vector<8x12xi32>
    %4 = vector.extract_strided_slice %0 {offsets = [0, 0], sizes = [8, 1], strides = [1, 1]} : vector<8x2xi32> to vector<8x1xi32>
    %5 = vector.extract_strided_slice %0 {offsets = [0, 1], sizes = [8, 1], strides = [1, 1]} : vector<8x2xi32> to vector<8x1xi32>
    %c6_i32_1 = arith.constant 6 : i32
    %6 = vector.broadcast %c6_i32_1 : i32 to vector<8x1xi32>
    %7 = arith.addi %5, %6 : vector<8x1xi32>
    %8 = vector.shape_cast %4 : vector<8x1xi32> to vector<8x1xi32>
    %9 = vector.broadcast %8 : vector<8x1xi32> to vector<8x12xi32>
    %10 = vector.shape_cast %7 : vector<8x1xi32> to vector<8x1xi32>
    %11 = vector.broadcast %10 : vector<8x1xi32> to vector<8x12xi32>
    %12 = arith.select %3, %9, %11 : vector<8x12xi1>, vector<8x12xi32>
    %13 = arith.cmpi eq, %1, %12 : vector<8x12xi32>
    %14 = arith.extui %13 : vector<8x12xi1> to vector<8x12xi32>
    %15 = arith.sitofp %14 : vector<8x12xi32> to vector<8x12xf32>
    %c0_2 = arith.constant 0 : index
    %c0_3 = arith.constant 0 : index
    %16 = vector.load %arg1[%c0_2, %c0_3] : memref<8x128xf32, #tpu.memory_space<vmem>>, vector<8x128xf32>
    %c0_4 = arith.constant 0 : index
    %c0_5 = arith.constant 0 : index
    %17 = vector.load %arg4[%c0_4, %c0_5] : memref<128x384xf32, #tpu.memory_space<vmem>>, vector<128x384xf32>
    %cst = arith.constant dense<0.000000e+00> : vector<8x384xf32>
    %18 = tpu.matmul %16, %17, %cst {dimension_numbers = #tpu.dot_dimension_numbers<[1], [0], [0], [1], [0, 0, 1, 1], [], []>} : vector<8x128xf32>, vector<128x384xf32>, vector<8x384xf32> -> vector<8x384xf32>
    %c0_6 = arith.constant 0 : index
    %c0_7 = arith.constant 0 : index
    %19 = vector.load %arg3[%c0_6, %c0_7] : memref<12x384xf32, #tpu.memory_space<vmem>>, vector<12x384xf32>
    %cst_8 = arith.constant dense<0.000000e+00> : vector<8x384xf32>
    %20 = tpu.matmul %15, %19, %cst_8 {dimension_numbers = #tpu.dot_dimension_numbers<[1], [0], [0], [1], [0, 0, 1, 1], [], []>} : vector<8x12xf32>, vector<12x384xf32>, vector<8x384xf32> -> vector<8x384xf32>
    %21 = arith.addf %18, %20 : vector<8x384xf32>
    %c0_9 = arith.constant 0 : index
    %c0_10 = arith.constant 0 : index
    %22 = vector.load %arg5[%c0_9, %c0_10] : memref<1x384xf32, #tpu.memory_space<vmem>>, vector<1x384xf32>
    %23 = vector.broadcast %22 : vector<1x384xf32> to vector<8x384xf32>
    %24 = arith.addf %21, %23 : vector<8x384xf32>
    %25 = vector.extract_strided_slice %24 {offsets = [0, 0], sizes = [8, 128], strides = [1, 1]} : vector<8x384xf32> to vector<8x128xf32>
    %26 = arith.negf %25 : vector<8x128xf32>
    %27 = math.exp %26 : vector<8x128xf32>
    %cst_11 = arith.constant 1.000000e+00 : f32
    %28 = vector.broadcast %cst_11 : f32 to vector<8x128xf32>
    %29 = arith.addf %28, %27 : vector<8x128xf32>
    %30 = arith.divf %28, %29 : vector<8x128xf32>
    %31 = vector.extract_strided_slice %24 {offsets = [0, 128], sizes = [8, 128], strides = [1, 1]} : vector<8x384xf32> to vector<8x128xf32>
    %32 = math.tanh %31 : vector<8x128xf32>
    %33 = vector.extract_strided_slice %24 {offsets = [0, 256], sizes = [8, 128], strides = [1, 1]} : vector<8x384xf32> to vector<8x128xf32>
    %34 = arith.negf %33 : vector<8x128xf32>
    %35 = math.exp %34 : vector<8x128xf32>
    %cst_12 = arith.constant 1.000000e+00 : f32
    %36 = vector.broadcast %cst_12 : f32 to vector<8x128xf32>
    %37 = arith.addf %36, %35 : vector<8x128xf32>
    %38 = arith.divf %36, %37 : vector<8x128xf32>
    %39 = arith.mulf %30, %32 : vector<8x128xf32>
    %40 = math.tanh %39 : vector<8x128xf32>
    %41 = arith.mulf %38, %40 : vector<8x128xf32>
    %c0_13 = arith.constant 0 : index
    %c0_14 = arith.constant 0 : index
    %42 = vector.load %arg6[%c0_13, %c0_14] : memref<128x384xf32, #tpu.memory_space<vmem>>, vector<128x384xf32>
    %cst_15 = arith.constant dense<0.000000e+00> : vector<8x384xf32>
    %43 = tpu.matmul %41, %42, %cst_15 {dimension_numbers = #tpu.dot_dimension_numbers<[1], [0], [0], [1], [0, 0, 1, 1], [], []>} : vector<8x128xf32>, vector<128x384xf32>, vector<8x384xf32> -> vector<8x384xf32>
    %c0_16 = arith.constant 0 : index
    %c0_17 = arith.constant 0 : index
    %44 = vector.load %arg7[%c0_16, %c0_17] : memref<1x384xf32, #tpu.memory_space<vmem>>, vector<1x384xf32>
    %45 = vector.broadcast %44 : vector<1x384xf32> to vector<8x384xf32>
    %46 = arith.addf %43, %45 : vector<8x384xf32>
    %47 = vector.extract_strided_slice %46 {offsets = [0, 0], sizes = [8, 128], strides = [1, 1]} : vector<8x384xf32> to vector<8x128xf32>
    %48 = arith.negf %47 : vector<8x128xf32>
    %49 = math.exp %48 : vector<8x128xf32>
    %cst_18 = arith.constant 1.000000e+00 : f32
    %50 = vector.broadcast %cst_18 : f32 to vector<8x128xf32>
    %51 = arith.addf %50, %49 : vector<8x128xf32>
    %52 = arith.divf %50, %51 : vector<8x128xf32>
    %53 = vector.extract_strided_slice %46 {offsets = [0, 128], sizes = [8, 128], strides = [1, 1]} : vector<8x384xf32> to vector<8x128xf32>
    %54 = math.tanh %53 : vector<8x128xf32>
    %55 = vector.extract_strided_slice %46 {offsets = [0, 256], sizes = [8, 128], strides = [1, 1]} : vector<8x384xf32> to vector<8x128xf32>
    %56 = arith.negf %55 : vector<8x128xf32>
    %57 = math.exp %56 : vector<8x128xf32>
    %cst_19 = arith.constant 1.000000e+00 : f32
    %58 = vector.broadcast %cst_19 : f32 to vector<8x128xf32>
    %59 = arith.addf %58, %57 : vector<8x128xf32>
    %60 = arith.divf %58, %59 : vector<8x128xf32>
    %61 = arith.mulf %52, %54 : vector<8x128xf32>
    %62 = math.tanh %61 : vector<8x128xf32>
    %63 = arith.mulf %60, %62 : vector<8x128xf32>
    %c0_20 = arith.constant 0 : index
    %c0_21 = arith.constant 0 : index
    %64 = vector.load %arg8[%c0_20, %c0_21] : memref<128x128xf32, #tpu.memory_space<vmem>>, vector<128x128xf32>
    %cst_22 = arith.constant dense<0.000000e+00> : vector<8x128xf32>
    %65 = tpu.matmul %63, %64, %cst_22 {dimension_numbers = #tpu.dot_dimension_numbers<[1], [0], [0], [1], [0, 0, 1, 1], [], []>} : vector<8x128xf32>, vector<128x128xf32>, vector<8x128xf32> -> vector<8x128xf32>
    %c0_23 = arith.constant 0 : index
    %c0_24 = arith.constant 0 : index
    %66 = vector.load %arg9[%c0_23, %c0_24] : memref<1x128xf32, #tpu.memory_space<vmem>>, vector<1x128xf32>
    %67 = vector.broadcast %66 : vector<1x128xf32> to vector<8x128xf32>
    %68 = arith.addf %65, %67 : vector<8x128xf32>
    %c0_25 = arith.constant 0 : index
    %c0_26 = arith.constant 0 : index
    %69 = vector.load %arg10[%c0_25, %c0_26] : memref<8x128xf32, #tpu.memory_space<vmem>>, vector<8x128xf32>
    tpu.vector_store %arg10[%c0_25, %c0_26], %68 {strides = array<i32>} : memref<8x128xf32, #tpu.memory_space<vmem>>, vector<8x128xf32>,
    return
  }
  func.func @transform_0(%arg0: i32) -> (i32, i32) {
    %c0_i32 = arith.constant 0 : i32
    %c0_i32_0 = arith.constant 0 : i32
    return %arg0, %c0_i32 : i32, i32
  }
  func.func @transform_1(%arg0: i32) -> (i32, i32) {
    %c0_i32 = arith.constant 0 : i32
    %c0_i32_0 = arith.constant 0 : i32
    return %arg0, %c0_i32 : i32, i32
  }
  func.func @transform_2(%arg0: i32) -> (i32, i32) {
    %c0_i32 = arith.constant 0 : i32
    %c0_i32_0 = arith.constant 0 : i32
    %c0_i32_1 = arith.constant 0 : i32
    return %c0_i32, %c0_i32_0 : i32, i32
  }
  func.func @transform_3(%arg0: i32) -> (i32, i32) {
    %c0_i32 = arith.constant 0 : i32
    %c0_i32_0 = arith.constant 0 : i32
    %c0_i32_1 = arith.constant 0 : i32
    return %c0_i32, %c0_i32_0 : i32, i32
  }
  func.func @transform_4(%arg0: i32) -> (i32, i32) {
    %c0_i32 = arith.constant 0 : i32
    %c0_i32_0 = arith.constant 0 : i32
    %c0_i32_1 = arith.constant 0 : i32
    return %c0_i32, %c0_i32_0 : i32, i32
  }
  func.func @transform_5(%arg0: i32) -> (i32, i32) {
    %c0_i32 = arith.constant 0 : i32
    %c0_i32_0 = arith.constant 0 : i32
    %c0_i32_1 = arith.constant 0 : i32
    return %c0_i32, %c0_i32_0 : i32, i32
  }
  func.func @transform_6(%arg0: i32) -> (i32, i32) {
    %c0_i32 = arith.constant 0 : i32
    %c0_i32_0 = arith.constant 0 : i32
    %c0_i32_1 = arith.constant 0 : i32
    return %c0_i32, %c0_i32_0 : i32, i32
  }
  func.func @transform_7(%arg0: i32) -> (i32, i32) {
    %c0_i32 = arith.constant 0 : i32
    %c0_i32_0 = arith.constant 0 : i32
    %c0_i32_1 = arith.constant 0 : i32
    return %c0_i32, %c0_i32_0 : i32, i32
  }
  func.func @transform_8(%arg0: i32) -> (i32, i32) {
    %c0_i32 = arith.constant 0 : i32
    %c0_i32_0 = arith.constant 0 : i32
    %c0_i32_1 = arith.constant 0 : i32
    return %c0_i32, %c0_i32_0 : i32, i32
  }
  func.func @transform_9(%arg0: i32) -> (i32, i32) {
    %c0_i32 = arith.constant 0 : i32
    %c0_i32_0 = arith.constant 0 : i32
    return %arg0, %c0_i32 : i32, i32
  }
}

</mosaic_0001>

<llo_original>
// kernel: tpu_custom_call.1
$region0: #{tpu_custom_call.1}
  #allocation0 [shape = 'u32[]', space=smem, size = 0x4, offset = 0x4, fixed_abs, tag = 'smem constant byte address 0x4 - core index']
  #allocation1 [shape = 'u32[144,128]{1,0:T(1,128)}', space=vmem, size = 0x12000, scoped, tag = 'internal scratch']
  %s0 = inlined_call_operand.vmem [shape: f32[8,128], index: 0, kind: input, shape index: {}]
  %s1 = inlined_call_operand.vmem [shape: s32[8,2], index: 1, kind: input, shape index: {}]
  %s2 = inlined_call_operand.hbm [shape: f32[12,384], index: 2, kind: input, shape index: {}]
  %s3 = inlined_call_operand.hbm [shape: f32[128,384], index: 3, kind: input, shape index: {}]
  %s4 = inlined_call_operand.vmem [shape: f32[1,384], index: 4, kind: input, shape index: {}]
  %s5 = inlined_call_operand.hbm [shape: f32[128,384], index: 5, kind: input, shape index: {}]
  %s6 = inlined_call_operand.vmem [shape: f32[1,384], index: 6, kind: input, shape index: {}]
  %s7 = inlined_call_operand.hbm [shape: f32[128,128], index: 7, kind: input, shape index: {}]
  %s8 = inlined_call_operand.vmem [shape: f32[1,128], index: 8, kind: input, shape index: {}]
  %s9 = inlined_call_operand.hbm [shape: f32[8,128], index: 9, kind: output, shape index: {}]
  %s10 = sld [smem:[#allocation0]]
  $region62: #{tpu_custom_call.1} parent=0
    _
  %s12 = ssub.s32 1, %s10
  %s13 = scalar_select 0, %s12, %s10
  $region1: #{tpu_custom_call.1} parent=0
    #allocation2 [shape = 'u8[24576]{0}', space=vmem, size = 0x6000, scoped, tag = 'input window, operand 2, single buffered']
    #allocation3 [shape = 's32[1]{0}', space=sflag, size = 0x4, scoped, tag = 'scoped memory for tpu_custom_call.1']
    #allocation4 [shape = 's32[1]{0}', space=sflag, size = 0x4, scoped, tag = 'scoped memory for tpu_custom_call.1']
    #allocation5 [shape = 'u8[196608]{0}', space=vmem, size = 0x30000, scoped, tag = 'input window, operand 3, single buffered']
    #allocation6 [shape = 's32[1]{0}', space=sflag, size = 0x4, scoped, tag = 'scoped memory for tpu_custom_call.1']
    #allocation7 [shape = 'u8[196608]{0}', space=vmem, size = 0x30000, scoped, tag = 'input window, operand 5, single buffered']
    #allocation8 [shape = 'u8[65536]{0}', space=vmem, size = 0x10000, scoped, tag = 'input window, operand 7, single buffered']
    #allocation9 [shape = 's32[1]{0}', space=sflag, size = 0x4, scoped, tag = 'scoped memory for tpu_custom_call.1']
    #allocation10 [shape = 'u8[4096]{0}', space=vmem, size = 0x1000, scoped, tag = 'output window, operand 0, single buffered']
    %14 = vsyncpa [#allocation3], 0
    %15 = vsyncpa [#allocation6], 0
    %16 = vsyncpa [#allocation9], 0
    %17 = vsyncpa [#allocation4], 0
    // Predicated region
    $region2: #{tpu_custom_call.1} parent=1 // pred_check
      _
    $region3: #{tpu_custom_call.1} parent=1 // pred_check_branch
      %19 = sbr.rel (0) target = $region5
    $region4: #{tpu_custom_call.1} parent=1 // pred_region
      _
    $region5: #{tpu_custom_call.1} parent=1 // pred_fallthru
      _
    // Predicated region
    $region6: #{tpu_custom_call.1} parent=1 // pred_check
      _
    $region7: #{tpu_custom_call.1} parent=1 // pred_check_branch
      %21 = sbr.rel (0) target = $region9
    $region8: #{tpu_custom_call.1} parent=1 // pred_region
      _
    $region9: #{tpu_custom_call.1} parent=1 // pred_fallthru
      _
    // Predicated region
    $region10: #{tpu_custom_call.1} parent=1 // pred_check
      _
    $region11: #{tpu_custom_call.1} parent=1 // pred_check_branch
      %23 = sbr.rel (0) target = $region13
    $region12: #{tpu_custom_call.1} parent=1 // pred_region
      %s25 = ssub.s32 768, 768
      %26 = vsyncadd [#allocation3], %s25
      %s27 = sshll.u32 [#allocation2], 4
      %s28 = int_to_ptr.vmem [resolvable:$true] %s27
      %33 = dma.hbm_to_vmem [thread:$0]  %s2, 768, %s28, [#allocation3], 384, 384, 24
    $region13: #{tpu_custom_call.1} parent=1 // pred_fallthru
      _
    // Predicated region
    $region14: #{tpu_custom_call.1} parent=1 // pred_check
      _
    $region15: #{tpu_custom_call.1} parent=1 // pred_check_branch
      %35 = sbr.rel (0) target = $region17
    $region16: #{tpu_custom_call.1} parent=1 // pred_region
      %s37 = ssub.s32 6144, 6144
      %38 = vsyncadd [#allocation6], %s37
      %s39 = sshll.u32 [#allocation5], 4
      %s40 = int_to_ptr.vmem [resolvable:$true] %s39
      %45 = dma.hbm_to_vmem [thread:$0]  %s3, 6144, %s40, [#allocation6], 384, 384, 24
    $region17: #{tpu_custom_call.1} parent=1 // pred_fallthru
      _
    // Predicated region
    $region18: #{tpu_custom_call.1} parent=1 // pred_check
      _
    $region19: #{tpu_custom_call.1} parent=1 // pred_check_branch
      %47 = sbr.rel (0) target = $region21
    $region20: #{tpu_custom_call.1} parent=1 // pred_region
      _
    $region21: #{tpu_custom_call.1} parent=1 // pred_fallthru
      _
    // Predicated region
    $region22: #{tpu_custom_call.1} parent=1 // pred_check
      _
    $region23: #{tpu_custom_call.1} parent=1 // pred_check_branch
      %49 = sbr.rel (0) target = $region25
    $region24: #{tpu_custom_call.1} parent=1 // pred_region
      %s51 = ssub.s32 6144, 6144
      %52 = vsyncadd [#allocation6], %s51
      %s53 = sshll.u32 [#allocation7], 4
      %s54 = int_to_ptr.vmem [resolvable:$true] %s53
      %59 = dma.hbm_to_vmem [thread:$0]  %s5, 6144, %s54, [#allocation6], 384, 384, 24
    $region25: #{tpu_custom_call.1} parent=1 // pred_fallthru
      _
    // Predicated region
    $region26: #{tpu_custom_call.1} parent=1 // pred_check
      _
    $region27: #{tpu_custom_call.1} parent=1 // pred_check_branch
      %61 = sbr.rel (0) target = $region29
    $region28: #{tpu_custom_call.1} parent=1 // pred_region
      _
    $region29: #{tpu_custom_call.1} parent=1 // pred_fallthru
      _
    // Predicated region
    $region30: #{tpu_custom_call.1} parent=1 // pred_check
      _
    $region31: #{tpu_custom_call.1} parent=1 // pred_check_branch
      %63 = sbr.rel (0) target = $region33
    $region32: #{tpu_custom_call.1} parent=1 // pred_region
      %s65 = ssub.s32 2048, 2048
      %66 = vsyncadd [#allocation9], %s65
      %s67 = sshll.u32 [#allocation8], 4
      %s68 = int_to_ptr.vmem [resolvable:$true] %s67
      %73 = dma.hbm_to_vmem [thread:$0]  %s7, 2048, %s68, [#allocation9], 128, 128, 8
    $region33: #{tpu_custom_call.1} parent=1 // pred_fallthru
      _
    // Predicated region
    $region34: #{tpu_custom_call.1} parent=1 // pred_check
      _
    $region35: #{tpu_custom_call.1} parent=1 // pred_check_branch
      %75 = sbr.rel (0) target = $region37
    $region36: #{tpu_custom_call.1} parent=1 // pred_region
      _
    $region37: #{tpu_custom_call.1} parent=1 // pred_fallthru
      _
    // Predicated region
    $region38: #{tpu_custom_call.1} parent=1 // pred_check
      _
    $region39: #{tpu_custom_call.1} parent=1 // pred_check_branch
      %77 = sbr.rel (0) target = $region41
    $region40: #{tpu_custom_call.1} parent=1 // pred_region
      %78 = dma.done [#allocation3], 768
    $region41: #{tpu_custom_call.1} parent=1 // pred_fallthru
      _
    // Predicated region
    $region42: #{tpu_custom_call.1} parent=1 // pred_check
      _
    $region43: #{tpu_custom_call.1} parent=1 // pred_check_branch
      %80 = sbr.rel (0) target = $region45
    $region44: #{tpu_custom_call.1} parent=1 // pred_region
      %81 = dma.done [#allocation6], 6144
    $region45: #{tpu_custom_call.1} parent=1 // pred_fallthru
      _
    // Predicated region
    $region46: #{tpu_custom_call.1} parent=1 // pred_check
      _
    $region47: #{tpu_custom_call.1} parent=1 // pred_check_branch
      %83 = sbr.rel (0) target = $region49
    $region48: #{tpu_custom_call.1} parent=1 // pred_region
      %84 = dma.done [#allocation6], 6144
    $region49: #{tpu_custom_call.1} parent=1 // pred_fallthru
      _
    // Predicated region
    $region50: #{tpu_custom_call.1} parent=1 // pred_check
      _
    $region51: #{tpu_custom_call.1} parent=1 // pred_check_branch
      %86 = sbr.rel (0) target = $region53
    $region52: #{tpu_custom_call.1} parent=1 // pred_region
      %87 = dma.done [#allocation9], 2048
    $region53: #{tpu_custom_call.1} parent=1 // pred_fallthru
      _
    %v88 = vld [vmem:[%s1] sm:$0xff]
    %v89 = vlaneseq
    %v90 = vand.u32 %v89, 127
    %vm91 = vcmp.lt.s32.totalorder %v90, 6
    %v92 = vadd.s32 %v88, 6
    %93 = vset.pattern.permute.xlu0 0
    %94 = vperm.xlu0 %93, %v88
    %v95 = vpop.permute.xlu0 %94
    %96 = vset.pattern.permute.xlu0 1
    %97 = vperm.xlu0 %96, %v92
    %v98 = vpop.permute.xlu0 %97
    %v99 = vsel %vm91, %v95, %v98
    %vm100 = vcmp.eq.s32.totalorder %v90, %v99
    %v101 = vsel %vm100, 1, 0
    %v102 = vcvt.s32.f32 %v101
    %v103 = vld [vmem:[%s0] sm:$0xff]
    %v104 = vld [vmem:[#allocation5] sm:$0xff]
    %v105 = vld [vmem:[#allocation5 + $0x8] sm:$0xff]
    %v106 = vld [vmem:[#allocation5 + $0x10] sm:$0xff]
    %v107 = vld [vmem:[#allocation5 + $0x18] sm:$0xff]
    %v108 = vld [vmem:[#allocation5 + $0x20] sm:$0xff]
    %v109 = vld [vmem:[#allocation5 + $0x28] sm:$0xff]
    %v110 = vld [vmem:[#allocation5 + $0x30] sm:$0xff]
    %v111 = vld [vmem:[#allocation5 + $0x38] sm:$0xff]
    %v112 = vld [vmem:[#allocation5 + $0x40] sm:$0xff]
    %v113 = vld [vmem:[#allocation5 + $0x48] sm:$0xff]
    %v114 = vld [vmem:[#allocation5 + $0x50] sm:$0xff]
    %v115 = vld [vmem:[#allocation5 + $0x58] sm:$0xff]
    %v116 = vld [vmem:[#allocation5 + $0x60] sm:$0xff]
    %v117 = vld [vmem:[#allocation5 + $0x68] sm:$0xff]
    %v118 = vld [vmem:[#allocation5 + $0x70] sm:$0xff]
    %v119 = vld [vmem:[#allocation5 + $0x78] sm:$0xff]
    %v120 = vld [vmem:[#allocation5 + $0x80] sm:$0xff]
    %v121 = vld [vmem:[#allocation5 + $0x88] sm:$0xff]
    %v122 = vld [vmem:[#allocation5 + $0x90] sm:$0xff]
    %v123 = vld [vmem:[#allocation5 + $0x98] sm:$0xff]
    %v124 = vld [vmem:[#allocation5 + $0xa0] sm:$0xff]
    %v125 = vld [vmem:[#allocation5 + $0xa8] sm:$0xff]
    %v126 = vld [vmem:[#allocation5 + $0xb0] sm:$0xff]
    %v127 = vld [vmem:[#allocation5 + $0xb8] sm:$0xff]
    %v128 = vld [vmem:[#allocation5 + $0xc0] sm:$0xff]
    %v129 = vld [vmem:[#allocation5 + $0xc8] sm:$0xff]
    %v130 = vld [vmem:[#allocation5 + $0xd0] sm:$0xff]
    %v131 = vld [vmem:[#allocation5 + $0xd8] sm:$0xff]
    %v132 = vld [vmem:[#allocation5 + $0xe0] sm:$0xff]
    %v133 = vld [vmem:[#allocation5 + $0xe8] sm:$0xff]
    %v134 = vld [vmem:[#allocation5 + $0xf0] sm:$0xff]
    %v135 = vld [vmem:[#allocation5 + $0xf8] sm:$0xff]
    %v136 = vld [vmem:[#allocation5 + $0x100] sm:$0xff]
    %v137 = vld [vmem:[#allocation5 + $0x108] sm:$0xff]
    %v138 = vld [vmem:[#allocation5 + $0x110] sm:$0xff]
    %v139 = vld [vmem:[#allocation5 + $0x118] sm:$0xff]
    %v140 = vld [vmem:[#allocation5 + $0x120] sm:$0xff]
    %v141 = vld [vmem:[#allocation5 + $0x128] sm:$0xff]
    %v142 = vld [vmem:[#allocation5 + $0x130] sm:$0xff]
    %v143 = vld [vmem:[#allocation5 + $0x138] sm:$0xff]
    %v144 = vld [vmem:[#allocation5 + $0x140] sm:$0xff]
    %v145 = vld [vmem:[#allocation5 + $0x148] sm:$0xff]
    %v146 = vld [vmem:[#allocation5 + $0x150] sm:$0xff]
    %v147 = vld [vmem:[#allocation5 + $0x158] sm:$0xff]
    %v148 = vld [vmem:[#allocation5 + $0x160] sm:$0xff]
    %v149 = vld [vmem:[#allocation5 + $0x168] sm:$0xff]
    %v150 = vld [vmem:[#allocation5 + $0x170] sm:$0xff]
    %v151 = vld [vmem:[#allocation5 + $0x178] sm:$0xff]
    %v152 = vld [vmem:[#allocation2] sm:$0xff]
    %v153 = vld [vmem:[#allocation2 + $0x8] sm:$0xff]
    %v154 = vld [vmem:[#allocation2 + $0x10] sm:$0xff]
    %v155 = vld [vmem:[#allocation2 + $0x18] sm:$0xf]
    %v156 = vld [vmem:[#allocation2 + $0x20] sm:$0xf]
    %v157 = vld [vmem:[#allocation2 + $0x28] sm:$0xf]
    %vm158 = vcmask 97280
    %v160 = vsel %vm158, %v102, 0
    %vm162 = vcmask 1043456
    %v164 = vsel %vm162, %v155, 0
    %v167 = vsel %vm162, %v156, 0
    %v170 = vsel %vm162, %v157, 0
    %172 = vmatprep.subr.mxu0 %v153
    %173 = vmatpush1.msra.mxu0 %v152
    %174 = vmatprep.subr.mxu0 %v167
    %175 = vmatpush1.msra.mxu0 %v164
    %176 = vmatprep.subr.mxu0 0.0
    %177 = vmatpush1.msra.mxu0 0.0
    %178 = vmatprep.subr.mxu0 0.0
    %179 = vmatpush1.msra.mxu0 0.0
    %180 = vmatprep.subr.mxu0 0.0
    %181 = vmatpush1.msra.mxu0 0.0
    %182 = vmatprep.subr.mxu0 0.0
    %183 = vmatpush1.msra.mxu0 0.0
    %184 = vmatprep.subr.mxu0 0.0
    %185 = vmatpush1.msra.mxu0 0.0
    %186 = vmatprep.subr.mxu0 0.0
    %187 = vmatpush1.msra.mxu0 0.0
    %188 = vmatprep.subr.mxu0 0.0
    %189 = vmatpush1.msra.mxu0 0.0
    %190 = vmatprep.subr.mxu0 0.0
    %191 = vmatpush1.msra.mxu0 0.0
    %192 = vmatprep.subr.mxu0 0.0
    %193 = vmatpush1.msra.mxu0 0.0
    %194 = vmatprep.subr.mxu0 0.0
    %195 = vmatpush1.msra.mxu0 0.0
    %196 = vmatprep.subr.mxu0 0.0
    %197 = vmatpush1.msra.mxu0 0.0
    %198 = vmatprep.subr.mxu0 0.0
    %199 = vmatpush1.msra.mxu0 0.0
    %200 = vmatprep.subr.mxu0 0.0
    %201 = vmatpush1.msra.mxu0 0.0
    %202 = vmatprep.subr.mxu0 0.0
    %203 = vmatpush1.msra.mxu0 0.0
    %204 = vmatprep.subr.mxu0 0.0
    %205 = vmatpush1.msra.mxu0 0.0
    %206 = vmatprep.subr.mxu0 0.0
    %207 = vmatpush1.msra.mxu0 0.0
    %208 = vmatprep.subr.mxu0 0.0
    %209 = vmatpush1.msra.mxu0 0.0
    %210 = vmatprep.subr.mxu0 0.0
    %211 = vmatpush1.msra.mxu0 0.0
    %212 = vmatprep.subr.mxu0 0.0
    %213 = vmatpush1.msra.mxu0 0.0
    %214 = vmatprep.subr.mxu0 0.0
    %215 = vmatpush1.msra.mxu0 0.0
    %216 = vmatprep.subr.mxu0 0.0
    %217 = vmatpush1.msra.mxu0 0.0
    %218 = vmatprep.subr.mxu0 0.0
    %219 = vmatpush1.msra.mxu0 0.0
    %220 = vmatprep.subr.mxu0 0.0
    %221 = vmatpush1.msra.mxu0 0.0
    %222 = vmatprep.subr.mxu0 0.0
    %223 = vmatpush1.msra.mxu0 0.0
    %224 = vmatprep.subr.mxu0 0.0
    %225 = vmatpush1.msra.mxu0 0.0
    %226 = vmatprep.subr.mxu0 0.0
    %227 = vmatpush1.msra.mxu0 0.0
    %228 = vmatprep.subr.mxu0 0.0
    %229 = vmatpush1.msra.mxu0 0.0
    %230 = vmatprep.subr.mxu0 0.0
    %231 = vmatpush1.msra.mxu0 0.0
    %232 = vmatprep.subr.mxu0 0.0
    %233 = vmatpush1.msra.mxu0 0.0
    %234 = vmatprep.subr.mxu0 0.0
    %235 = vmatpush1.msra.mxu0 0.0
    %236 = vmatprep.mubr.f32.mxu0 0.0
    %237 = vmatmul.mubr.f32.gmra.mrb[0].mxu0 %v160
    %v238 = vpop.f32.mrb[0].mxu0
    %v239 = vadd.f32 0.0, %v238
    %v240 = vpop.f32.mrb[0].mxu0
    %v241 = vadd.f32 0.0, %v240
    %242 = vdwg.mxu0
    %243 = vmatprep.subr.mxu0 0.0
    %244 = vmatpush1.msra.mxu0 %v154
    %245 = vmatprep.subr.mxu0 0.0
    %246 = vmatpush1.msra.mxu0 %v170
    %247 = vmatprep.subr.mxu0 0.0
    %248 = vmatpush1.msra.mxu0 0.0
    %249 = vmatprep.subr.mxu0 0.0
    %250 = vmatpush1.msra.mxu0 0.0
    %251 = vmatprep.subr.mxu0 0.0
    %252 = vmatpush1.msra.mxu0 0.0
    %253 = vmatprep.subr.mxu0 0.0
    %254 = vmatpush1.msra.mxu0 0.0
    %255 = vmatprep.subr.mxu0 0.0
    %256 = vmatpush1.msra.mxu0 0.0
    %257 = vmatprep.subr.mxu0 0.0
    %258 = vmatpush1.msra.mxu0 0.0
    %259 = vmatprep.subr.mxu0 0.0
    %260 = vmatpush1.msra.mxu0 0.0
    %261 = vmatprep.subr.mxu0 0.0
    %262 = vmatpush1.msra.mxu0 0.0
    %263 = vmatprep.subr.mxu0 0.0
    %264 = vmatpush1.msra.mxu0 0.0
    %265 = vmatprep.subr.mxu0 0.0
    %266 = vmatpush1.msra.mxu0 0.0
    %267 = vmatprep.subr.mxu0 0.0
    %268 = vmatpush1.msra.mxu0 0.0
    %269 = vmatprep.subr.mxu0 0.0
    %270 = vmatpush1.msra.mxu0 0.0
    %271 = vmatprep.subr.mxu0 0.0
    %272 = vmatpush1.msra.mxu0 0.0
    %273 = vmatprep.subr.mxu0 0.0
    %274 = vmatpush1.msra.mxu0 0.0
    %275 = vmatprep.subr.mxu0 0.0
    %276 = vmatpush1.msra.mxu0 0.0
    %277 = vmatprep.subr.mxu0 0.0
    %278 = vmatpush1.msra.mxu0 0.0
    %279 = vmatprep.subr.mxu0 0.0
    %280 = vmatpush1.msra.mxu0 0.0
    %281 = vmatprep.subr.mxu0 0.0
    %282 = vmatpush1.msra.mxu0 0.0
    %283 = vmatprep.subr.mxu0 0.0
    %284 = vmatpush1.msra.mxu0 0.0
    %285 = vmatprep.subr.mxu0 0.0
    %286 = vmatpush1.msra.mxu0 0.0
    %287 = vmatprep.subr.mxu0 0.0
    %288 = vmatpush1.msra.mxu0 0.0
    %289 = vmatprep.subr.mxu0 0.0
    %290 = vmatpush1.msra.mxu0 0.0
    %291 = vmatprep.subr.mxu0 0.0
    %292 = vmatpush1.msra.mxu0 0.0
    %293 = vmatprep.subr.mxu0 0.0
    %294 = vmatpush1.msra.mxu0 0.0
    %295 = vmatprep.subr.mxu0 0.0
    %296 = vmatpush1.msra.mxu0 0.0
    %297 = vmatprep.subr.mxu0 0.0
    %298 = vmatpush1.msra.mxu0 0.0
    %299 = vmatprep.subr.mxu0 0.0
    %300 = vmatpush1.msra.mxu0 0.0
    %301 = vmatprep.subr.mxu0 0.0
    %302 = vmatpush1.msra.mxu0 0.0
    %303 = vmatprep.subr.mxu0 0.0
    %304 = vmatpush1.msra.mxu0 0.0
    %305 = vmatprep.subr.mxu0 0.0
    %306 = vmatpush1.msra.mxu0 0.0
    %307 = vmatprep.mubr.f32.mxu0 0.0
    %308 = vmatmul.mubr.f32.gmra.mrb[0].mxu0 %v160
    %v309 = vpop.f32.mrb[0].mxu0
    %v310 = vadd.f32 0.0, %v309
    %v311 = vpop.f32.mrb[0].mxu0
    %312 = vdwg.mxu0
    %313 = vmatprep.subr.mxu0 %v105
    %314 = vmatpush1.msra.mxu0 %v104
    %315 = vmatprep.subr.mxu0 %v108
    %316 = vmatpush1.msra.mxu0 %v107
    %317 = vmatprep.subr.mxu0 %v111
    %318 = vmatpush1.msra.mxu0 %v110
    %319 = vmatprep.subr.mxu0 %v114
    %320 = vmatpush1.msra.mxu0 %v113
    %321 = vmatprep.subr.mxu0 %v117
    %322 = vmatpush1.msra.mxu0 %v116
    %323 = vmatprep.subr.mxu0 %v120
    %324 = vmatpush1.msra.mxu0 %v119
    %325 = vmatprep.subr.mxu0 %v123
    %326 = vmatpush1.msra.mxu0 %v122
    %327 = vmatprep.subr.mxu0 %v126
    %328 = vmatpush1.msra.mxu0 %v125
    %329 = vmatprep.subr.mxu0 %v129
    %330 = vmatpush1.msra.mxu0 %v128
    %331 = vmatprep.subr.mxu0 %v132
    %332 = vmatpush1.msra.mxu0 %v131
    %333 = vmatprep.subr.mxu0 %v135
    %334 = vmatpush1.msra.mxu0 %v134
    %335 = vmatprep.subr.mxu0 %v138
    %336 = vmatpush1.msra.mxu0 %v137
    %337 = vmatprep.subr.mxu0 %v141
    %338 = vmatpush1.msra.mxu0 %v140
    %339 = vmatprep.subr.mxu0 %v144
    %340 = vmatpush1.msra.mxu0 %v143
    %341 = vmatprep.subr.mxu0 %v147
    %342 = vmatpush1.msra.mxu0 %v146
    %343 = vmatprep.subr.mxu0 %v150
    %344 = vmatpush1.msra.mxu0 %v149
    %345 = vmatprep.subr.mxu0 0.0
    %346 = vmatpush1.msra.mxu0 0.0
    %347 = vmatprep.subr.mxu0 0.0
    %348 = vmatpush1.msra.mxu0 0.0
    %349 = vmatprep.subr.mxu0 0.0
    %350 = vmatpush1.msra.mxu0 0.0
    %351 = vmatprep.subr.mxu0 0.0
    %352 = vmatpush1.msra.mxu0 0.0
    %353 = vmatprep.subr.mxu0 0.0
    %354 = vmatpush1.msra.mxu0 0.0
    %355 = vmatprep.subr.mxu0 0.0
    %356 = vmatpush1.msra.mxu0 0.0
    %357 = vmatprep.subr.mxu0 0.0
    %358 = vmatpush1.msra.mxu0 0.0
    %359 = vmatprep.subr.mxu0 0.0
    %360 = vmatpush1.msra.mxu0 0.0
    %361 = vmatprep.subr.mxu0 0.0
    %362 = vmatpush1.msra.mxu0 0.0
    %363 = vmatprep.subr.mxu0 0.0
    %364 = vmatpush1.msra.mxu0 0.0
    %365 = vmatprep.subr.mxu0 0.0
    %366 = vmatpush1.msra.mxu0 0.0
    %367 = vmatprep.subr.mxu0 0.0
    %368 = vmatpush1.msra.mxu0 0.0
    %369 = vmatprep.subr.mxu0 0.0
    %370 = vmatpush1.msra.mxu0 0.0
    %371 = vmatprep.subr.mxu0 0.0
    %372 = vmatpush1.msra.mxu0 0.0
    %373 = vmatprep.subr.mxu0 0.0
    %374 = vmatpush1.msra.mxu0 0.0
    %375 = vmatprep.subr.mxu0 0.0
    %376 = vmatpush1.msra.mxu0 0.0
    %377 = vmatprep.mubr.f32.mxu0 0.0
    %378 = vmatmul.mubr.f32.gmra.mrb[0].mxu0 %v103
    %v379 = vpop.f32.mrb[0].mxu0
    %v380 = vadd.f32 %v239, %v379
    %v381 = vpop.f32.mrb[0].mxu0
    %v382 = vadd.f32 %v241, %v381
    %383 = vdwg.mxu0
    %384 = vmatprep.subr.mxu0 0.0
    %385 = vmatpush1.msra.mxu0 %v106
    %386 = vmatprep.subr.mxu0 0.0
    %387 = vmatpush1.msra.mxu0 %v109
    %388 = vmatprep.subr.mxu0 0.0
    %389 = vmatpush1.msra.mxu0 %v112
    %390 = vmatprep.subr.mxu0 0.0
    %391 = vmatpush1.msra.mxu0 %v115
    %392 = vmatprep.subr.mxu0 0.0
    %393 = vmatpush1.msra.mxu0 %v118
    %394 = vmatprep.subr.mxu0 0.0
    %395 = vmatpush1.msra.mxu0 %v121
    %396 = vmatprep.subr.mxu0 0.0
    %397 = vmatpush1.msra.mxu0 %v124
    %398 = vmatprep.subr.mxu0 0.0
    %399 = vmatpush1.msra.mxu0 %v127
    %400 = vmatprep.subr.mxu0 0.0
    %401 = vmatpush1.msra.mxu0 %v130
    %402 = vmatprep.subr.mxu0 0.0
    %403 = vmatpush1.msra.mxu0 %v133
    %404 = vmatprep.subr.mxu0 0.0
    %405 = vmatpush1.msra.mxu0 %v136
    %406 = vmatprep.subr.mxu0 0.0
    %407 = vmatpush1.msra.mxu0 %v139
    %408 = vmatprep.subr.mxu0 0.0
    %409 = vmatpush1.msra.mxu0 %v142
    %410 = vmatprep.subr.mxu0 0.0
    %411 = vmatpush1.msra.mxu0 %v145
    %412 = vmatprep.subr.mxu0 0.0
    %413 = vmatpush1.msra.mxu0 %v148
    %414 = vmatprep.subr.mxu0 0.0
    %415 = vmatpush1.msra.mxu0 %v151
    %416 = vmatprep.subr.mxu0 0.0
    %417 = vmatpush1.msra.mxu0 0.0
    %418 = vmatprep.subr.mxu0 0.0
    %419 = vmatpush1.msra.mxu0 0.0
    %420 = vmatprep.subr.mxu0 0.0
    %421 = vmatpush1.msra.mxu0 0.0
    %422 = vmatprep.subr.mxu0 0.0
    %423 = vmatpush1.msra.mxu0 0.0
    %424 = vmatprep.subr.mxu0 0.0
    %425 = vmatpush1.msra.mxu0 0.0
    %426 = vmatprep.subr.mxu0 0.0
    %427 = vmatpush1.msra.mxu0 0.0
    %428 = vmatprep.subr.mxu0 0.0
    %429 = vmatpush1.msra.mxu0 0.0
    %430 = vmatprep.subr.mxu0 0.0
    %431 = vmatpush1.msra.mxu0 0.0
    %432 = vmatprep.subr.mxu0 0.0
    %433 = vmatpush1.msra.mxu0 0.0
    %434 = vmatprep.subr.mxu0 0.0
    %435 = vmatpush1.msra.mxu0 0.0
    %436 = vmatprep.subr.mxu0 0.0
    %437 = vmatpush1.msra.mxu0 0.0
    %438 = vmatprep.subr.mxu0 0.0
    %439 = vmatpush1.msra.mxu0 0.0
    %440 = vmatprep.subr.mxu0 0.0
    %441 = vmatpush1.msra.mxu0 0.0
    %442 = vmatprep.subr.mxu0 0.0
    %443 = vmatpush1.msra.mxu0 0.0
    %444 = vmatprep.subr.mxu0 0.0
    %445 = vmatpush1.msra.mxu0 0.0
    %446 = vmatprep.subr.mxu0 0.0
    %447 = vmatpush1.msra.mxu0 0.0
    %448 = vmatprep.mubr.f32.mxu0 0.0
    %449 = vmatmul.mubr.f32.gmra.mrb[0].mxu0 %v103
    %v450 = vpop.f32.mrb[0].mxu0
    %v451 = vadd.f32 %v310, %v450
    %v452 = vpop.f32.mrb[0].mxu0
    %453 = vdwg.mxu0
    %v454 = vld [vmem:[%s4] sm:$0x7]
    %v456 = vlaneseq
    %v457 = vshrl.u32 %v456, 7
    %v458 = vsub.s32 0, %v457
    %v459 = vrot.slane %v454, %v458
    %v460 = vlaneseq
    %v461 = vshrl.u32 %v460, 7
    %v462 = vsub.s32 1, %v461
    %v463 = vrot.slane %v454, %v462
    %v464 = vlaneseq
    %v465 = vshrl.u32 %v464, 7
    %v466 = vsub.s32 2, %v465
    %v467 = vrot.slane %v454, %v466
    %v471 = vadd.f32 %v380, %v459
    %v472 = vadd.f32 %v382, %v463
    %v473 = vadd.f32 %v451, %v467
    %v474 = vxor.u32 %v471, 2147483648
    %v475 = vmul.f32 %v474, 1.442695
    %v476 = vpow.pop %v475
    %v477 = vadd.f32 %v476, 1.0
    %v478 = vrcp.pop %v477
    %v479 = vmul.f32 1.0, %v478
    %v480 = vtanh.pop %v472
    %v481 = vxor.u32 %v473, 2147483648
    %v482 = vmul.f32 %v481, 1.442695
    %v483 = vpow.pop %v482
    %v484 = vadd.f32 %v483, 1.0
    %v485 = vrcp.pop %v484
    %v486 = vmul.f32 1.0, %v485
    %v487 = vmul.f32 %v479, %v480
    %v488 = vtanh.pop %v487
    %v489 = vmul.f32 %v486, %v488
    %v490 = vld [vmem:[#allocation7] sm:$0xff]
    %v491 = vld [vmem:[#allocation7 + $0x8] sm:$0xff]
    %v492 = vld [vmem:[#allocation7 + $0x10] sm:$0xff]
    %v493 = vld [vmem:[#allocation7 + $0x18] sm:$0xff]
    %v494 = vld [vmem:[#allocation7 + $0x20] sm:$0xff]
    %v495 = vld [vmem:[#allocation7 + $0x28] sm:$0xff]
    %v496 = vld [vmem:[#allocation7 + $0x30] sm:$0xff]
    %v497 = vld [vmem:[#allocation7 + $0x38] sm:$0xff]
    %v498 = vld [vmem:[#allocation7 + $0x40] sm:$0xff]
    %v499 = vld [vmem:[#allocation7 + $0x48] sm:$0xff]
    %v500 = vld [vmem:[#allocation7 + $0x50] sm:$0xff]
    %v501 = vld [vmem:[#allocation7 + $0x58] sm:$0xff]
    %v502 = vld [vmem:[#allocation7 + $0x60] sm:$0xff]
    %v503 = vld [vmem:[#allocation7 + $0x68] sm:$0xff]
    %v504 = vld [vmem:[#allocation7 + $0x70] sm:$0xff]
    %v505 = vld [vmem:[#allocation7 + $0x78] sm:$0xff]
    %v506 = vld [vmem:[#allocation7 + $0x80] sm:$0xff]
    %v507 = vld [vmem:[#allocation7 + $0x88] sm:$0xff]
    %v508 = vld [vmem:[#allocation7 + $0x90] sm:$0xff]
    %v509 = vld [vmem:[#allocation7 + $0x98] sm:$0xff]
    %v510 = vld [vmem:[#allocation7 + $0xa0] sm:$0xff]
    %v511 = vld [vmem:[#allocation7 + $0xa8] sm:$0xff]
    %v512 = vld [vmem:[#allocation7 + $0xb0] sm:$0xff]
    %v513 = vld [vmem:[#allocation7 + $0xb8] sm:$0xff]
    %v514 = vld [vmem:[#allocation7 + $0xc0] sm:$0xff]
    %v515 = vld [vmem:[#allocation7 + $0xc8] sm:$0xff]
    %v516 = vld [vmem:[#allocation7 + $0xd0] sm:$0xff]
    %v517 = vld [vmem:[#allocation7 + $0xd8] sm:$0xff]
    %v518 = vld [vmem:[#allocation7 + $0xe0] sm:$0xff]
    %v519 = vld [vmem:[#allocation7 + $0xe8] sm:$0xff]
    %v520 = vld [vmem:[#allocation7 + $0xf0] sm:$0xff]
    %v521 = vld [vmem:[#allocation7 + $0xf8] sm:$0xff]
    %v522 = vld [vmem:[#allocation7 + $0x100] sm:$0xff]
    %v523 = vld [vmem:[#allocation7 + $0x108] sm:$0xff]
    %v524 = vld [vmem:[#allocation7 + $0x110] sm:$0xff]
    %v525 = vld [vmem:[#allocation7 + $0x118] sm:$0xff]
    %v526 = vld [vmem:[#allocation7 + $0x120] sm:$0xff]
    %v527 = vld [vmem:[#allocation7 + $0x128] sm:$0xff]
    %v528 = vld [vmem:[#allocation7 + $0x130] sm:$0xff]
    %v529 = vld [vmem:[#allocation7 + $0x138] sm:$0xff]
    %v530 = vld [vmem:[#allocation7 + $0x140] sm:$0xff]
    %v531 = vld [vmem:[#allocation7 + $0x148] sm:$0xff]
    %v532 = vld [vmem:[#allocation7 + $0x150] sm:$0xff]
    %v533 = vld [vmem:[#allocation7 + $0x158] sm:$0xff]
    %v534 = vld [vmem:[#allocation7 + $0x160] sm:$0xff]
    %v535 = vld [vmem:[#allocation7 + $0x168] sm:$0xff]
    %v536 = vld [vmem:[#allocation7 + $0x170] sm:$0xff]
    %v537 = vld [vmem:[#allocation7 + $0x178] sm:$0xff]
    %v538 = vld [vmem:[%s6] sm:$0x7]
    %v540 = vlaneseq
    %v541 = vshrl.u32 %v540, 7
    %v542 = vsub.s32 0, %v541
    %v543 = vrot.slane %v538, %v542
    %v544 = vlaneseq
    %v545 = vshrl.u32 %v544, 7
    %v546 = vsub.s32 1, %v545
    %v547 = vrot.slane %v538, %v546
    %v548 = vlaneseq
    %v549 = vshrl.u32 %v548, 7
    %v550 = vsub.s32 2, %v549
    %v551 = vrot.slane %v538, %v550
    %555 = vmatprep.subr.mxu0 %v491
    %556 = vmatpush1.msra.mxu0 %v490
    %557 = vmatprep.subr.mxu0 %v494
    %558 = vmatpush1.msra.mxu0 %v493
    %559 = vmatprep.subr.mxu0 %v497
    %560 = vmatpush1.msra.mxu0 %v496
    %561 = vmatprep.subr.mxu0 %v500
    %562 = vmatpush1.msra.mxu0 %v499
    %563 = vmatprep.subr.mxu0 %v503
    %564 = vmatpush1.msra.mxu0 %v502
    %565 = vmatprep.subr.mxu0 %v506
    %566 = vmatpush1.msra.mxu0 %v505
    %567 = vmatprep.subr.mxu0 %v509
    %568 = vmatpush1.msra.mxu0 %v508
    %569 = vmatprep.subr.mxu0 %v512
    %570 = vmatpush1.msra.mxu0 %v511
    %571 = vmatprep.subr.mxu0 %v515
    %572 = vmatpush1.msra.mxu0 %v514
    %573 = vmatprep.subr.mxu0 %v518
    %574 = vmatpush1.msra.mxu0 %v517
    %575 = vmatprep.subr.mxu0 %v521
    %576 = vmatpush1.msra.mxu0 %v520
    %577 = vmatprep.subr.mxu0 %v524
    %578 = vmatpush1.msra.mxu0 %v523
    %579 = vmatprep.subr.mxu0 %v527
    %580 = vmatpush1.msra.mxu0 %v526
    %581 = vmatprep.subr.mxu0 %v530
    %582 = vmatpush1.msra.mxu0 %v529
    %583 = vmatprep.subr.mxu0 %v533
    %584 = vmatpush1.msra.mxu0 %v532
    %585 = vmatprep.subr.mxu0 %v536
    %586 = vmatpush1.msra.mxu0 %v535
    %587 = vmatprep.subr.mxu0 0.0
    %588 = vmatpush1.msra.mxu0 0.0
    %589 = vmatprep.subr.mxu0 0.0
    %590 = vmatpush1.msra.mxu0 0.0
    %591 = vmatprep.subr.mxu0 0.0
    %592 = vmatpush1.msra.mxu0 0.0
    %593 = vmatprep.subr.mxu0 0.0
    %594 = vmatpush1.msra.mxu0 0.0
    %595 = vmatprep.subr.mxu0 0.0
    %596 = vmatpush1.msra.mxu0 0.0
    %597 = vmatprep.subr.mxu0 0.0
    %598 = vmatpush1.msra.mxu0 0.0
    %599 = vmatprep.subr.mxu0 0.0
    %600 = vmatpush1.msra.mxu0 0.0
    %601 = vmatprep.subr.mxu0 0.0
    %602 = vmatpush1.msra.mxu0 0.0
    %603 = vmatprep.subr.mxu0 0.0
    %604 = vmatpush1.msra.mxu0 0.0
    %605 = vmatprep.subr.mxu0 0.0
    %606 = vmatpush1.msra.mxu0 0.0
    %607 = vmatprep.subr.mxu0 0.0
    %608 = vmatpush1.msra.mxu0 0.0
    %609 = vmatprep.subr.mxu0 0.0
    %610 = vmatpush1.msra.mxu0 0.0
    %611 = vmatprep.subr.mxu0 0.0
    %612 = vmatpush1.msra.mxu0 0.0
    %613 = vmatprep.subr.mxu0 0.0
    %614 = vmatpush1.msra.mxu0 0.0
    %615 = vmatprep.subr.mxu0 0.0
    %616 = vmatpush1.msra.mxu0 0.0
    %617 = vmatprep.subr.mxu0 0.0
    %618 = vmatpush1.msra.mxu0 0.0
    %619 = vmatprep.mubr.f32.mxu0 0.0
    %620 = vmatmul.mubr.f32.gmra.mrb[0].mxu0 %v489
    %v621 = vpop.f32.mrb[0].mxu0
    %v622 = vadd.f32 %v543, %v621
    %v623 = vpop.f32.mrb[0].mxu0
    %v624 = vadd.f32 %v547, %v623
    %625 = vdwg.mxu0
    %626 = vmatprep.subr.mxu0 0.0
    %627 = vmatpush1.msra.mxu0 %v492
    %628 = vmatprep.subr.mxu0 0.0
    %629 = vmatpush1.msra.mxu0 %v495
    %630 = vmatprep.subr.mxu0 0.0
    %631 = vmatpush1.msra.mxu0 %v498
    %632 = vmatprep.subr.mxu0 0.0
    %633 = vmatpush1.msra.mxu0 %v501
    %634 = vmatprep.subr.mxu0 0.0
    %635 = vmatpush1.msra.mxu0 %v504
    %636 = vmatprep.subr.mxu0 0.0
    %637 = vmatpush1.msra.mxu0 %v507
    %638 = vmatprep.subr.mxu0 0.0
    %639 = vmatpush1.msra.mxu0 %v510
    %640 = vmatprep.subr.mxu0 0.0
    %641 = vmatpush1.msra.mxu0 %v513
    %642 = vmatprep.subr.mxu0 0.0
    %643 = vmatpush1.msra.mxu0 %v516
    %644 = vmatprep.subr.mxu0 0.0
    %645 = vmatpush1.msra.mxu0 %v519
    %646 = vmatprep.subr.mxu0 0.0
    %647 = vmatpush1.msra.mxu0 %v522
    %648 = vmatprep.subr.mxu0 0.0
    %649 = vmatpush1.msra.mxu0 %v525
    %650 = vmatprep.subr.mxu0 0.0
    %651 = vmatpush1.msra.mxu0 %v528
    %652 = vmatprep.subr.mxu0 0.0
    %653 = vmatpush1.msra.mxu0 %v531
    %654 = vmatprep.subr.mxu0 0.0
    %655 = vmatpush1.msra.mxu0 %v534
    %656 = vmatprep.subr.mxu0 0.0
    %657 = vmatpush1.msra.mxu0 %v537
    %658 = vmatprep.subr.mxu0 0.0
    %659 = vmatpush1.msra.mxu0 0.0
    %660 = vmatprep.subr.mxu0 0.0
    %661 = vmatpush1.msra.mxu0 0.0
    %662 = vmatprep.subr.mxu0 0.0
    %663 = vmatpush1.msra.mxu0 0.0
    %664 = vmatprep.subr.mxu0 0.0
    %665 = vmatpush1.msra.mxu0 0.0
    %666 = vmatprep.subr.mxu0 0.0
    %667 = vmatpush1.msra.mxu0 0.0
    %668 = vmatprep.subr.mxu0 0.0
    %669 = vmatpush1.msra.mxu0 0.0
    %670 = vmatprep.subr.mxu0 0.0
    %671 = vmatpush1.msra.mxu0 0.0
    %672 = vmatprep.subr.mxu0 0.0
    %673 = vmatpush1.msra.mxu0 0.0
    %674 = vmatprep.subr.mxu0 0.0
    %675 = vmatpush1.msra.mxu0 0.0
    %676 = vmatprep.subr.mxu0 0.0
    %677 = vmatpush1.msra.mxu0 0.0
    %678 = vmatprep.subr.mxu0 0.0
    %679 = vmatpush1.msra.mxu0 0.0
    %680 = vmatprep.subr.mxu0 0.0
    %681 = vmatpush1.msra.mxu0 0.0
    %682 = vmatprep.subr.mxu0 0.0
    %683 = vmatpush1.msra.mxu0 0.0
    %684 = vmatprep.subr.mxu0 0.0
    %685 = vmatpush1.msra.mxu0 0.0
    %686 = vmatprep.subr.mxu0 0.0
    %687 = vmatpush1.msra.mxu0 0.0
    %688 = vmatprep.subr.mxu0 0.0
    %689 = vmatpush1.msra.mxu0 0.0
    %690 = vmatprep.mubr.f32.mxu0 0.0
    %691 = vmatmul.mubr.f32.gmra.mrb[0].mxu0 %v489
    %v692 = vpop.f32.mrb[0].mxu0
    %v693 = vadd.f32 %v551, %v692
    %v694 = vpop.f32.mrb[0].mxu0
    %695 = vdwg.mxu0
    %v696 = vxor.u32 %v622, 2147483648
    %v697 = vmul.f32 %v696, 1.442695
    %v698 = vpow.pop %v697
    %v699 = vadd.f32 %v698, 1.0
    %v700 = vrcp.pop %v699
    %v701 = vmul.f32 1.0, %v700
    %v702 = vtanh.pop %v624
    %v703 = vxor.u32 %v693, 2147483648
    %v704 = vmul.f32 %v703, 1.442695
    %v705 = vpow.pop %v704
    %v706 = vadd.f32 %v705, 1.0
    %v707 = vrcp.pop %v706
    %v708 = vmul.f32 1.0, %v707
    %v709 = vmul.f32 %v701, %v702
    %v710 = vtanh.pop %v709
    %v711 = vmul.f32 %v708, %v710
    %v712 = vld [vmem:[#allocation8] sm:$0xff]
    %v713 = vld [vmem:[#allocation8 + $0x8] sm:$0xff]
    %v714 = vld [vmem:[#allocation8 + $0x10] sm:$0xff]
    %v715 = vld [vmem:[#allocation8 + $0x18] sm:$0xff]
    %v716 = vld [vmem:[#allocation8 + $0x20] sm:$0xff]
    %v717 = vld [vmem:[#allocation8 + $0x28] sm:$0xff]
    %v718 = vld [vmem:[#allocation8 + $0x30] sm:$0xff]
    %v719 = vld [vmem:[#allocation8 + $0x38] sm:$0xff]
    %v720 = vld [vmem:[#allocation8 + $0x40] sm:$0xff]
    %v721 = vld [vmem:[#allocation8 + $0x48] sm:$0xff]
    %v722 = vld [vmem:[#allocation8 + $0x50] sm:$0xff]
    %v723 = vld [vmem:[#allocation8 + $0x58] sm:$0xff]
    %v724 = vld [vmem:[#allocation8 + $0x60] sm:$0xff]
    %v725 = vld [vmem:[#allocation8 + $0x68] sm:$0xff]
    %v726 = vld [vmem:[#allocation8 + $0x70] sm:$0xff]
    %v727 = vld [vmem:[#allocation8 + $0x78] sm:$0xff]
    %v728 = vld [vmem:[%s8] sm:$0x1]
    %v730 = vlaneseq
    %v731 = vshrl.u32 %v730, 7
    %v732 = vsub.s32 0, %v731
    %v733 = vrot.slane %v728, %v732
    %735 = vmatprep.subr.mxu0 0.0
    %736 = vmatpush1.msra.mxu0 %v712
    %737 = vmatprep.subr.mxu0 0.0
    %738 = vmatpush1.msra.mxu0 %v713
    %739 = vmatprep.subr.mxu0 0.0
    %740 = vmatpush1.msra.mxu0 %v714
    %741 = vmatprep.subr.mxu0 0.0
    %742 = vmatpush1.msra.mxu0 %v715
    %743 = vmatprep.subr.mxu0 0.0
    %744 = vmatpush1.msra.mxu0 %v716
    %745 = vmatprep.subr.mxu0 0.0
    %746 = vmatpush1.msra.mxu0 %v717
    %747 = vmatprep.subr.mxu0 0.0
    %748 = vmatpush1.msra.mxu0 %v718
    %749 = vmatprep.subr.mxu0 0.0
    %750 = vmatpush1.msra.mxu0 %v719
    %751 = vmatprep.subr.mxu0 0.0
    %752 = vmatpush1.msra.mxu0 %v720
    %753 = vmatprep.subr.mxu0 0.0
    %754 = vmatpush1.msra.mxu0 %v721
    %755 = vmatprep.subr.mxu0 0.0
    %756 = vmatpush1.msra.mxu0 %v722
    %757 = vmatprep.subr.mxu0 0.0
    %758 = vmatpush1.msra.mxu0 %v723
    %759 = vmatprep.subr.mxu0 0.0
    %760 = vmatpush1.msra.mxu0 %v724
    %761 = vmatprep.subr.mxu0 0.0
    %762 = vmatpush1.msra.mxu0 %v725
    %763 = vmatprep.subr.mxu0 0.0
    %764 = vmatpush1.msra.mxu0 %v726
    %765 = vmatprep.subr.mxu0 0.0
    %766 = vmatpush1.msra.mxu0 %v727
    %767 = vmatprep.subr.mxu0 0.0
    %768 = vmatpush1.msra.mxu0 0.0
    %769 = vmatprep.subr.mxu0 0.0
    %770 = vmatpush1.msra.mxu0 0.0
    %771 = vmatprep.subr.mxu0 0.0
    %772 = vmatpush1.msra.mxu0 0.0
    %773 = vmatprep.subr.mxu0 0.0
    %774 = vmatpush1.msra.mxu0 0.0
    %775 = vmatprep.subr.mxu0 0.0
    %776 = vmatpush1.msra.mxu0 0.0
    %777 = vmatprep.subr.mxu0 0.0
    %778 = vmatpush1.msra.mxu0 0.0
    %779 = vmatprep.subr.mxu0 0.0
    %780 = vmatpush1.msra.mxu0 0.0
    %781 = vmatprep.subr.mxu0 0.0
    %782 = vmatpush1.msra.mxu0 0.0
    %783 = vmatprep.subr.mxu0 0.0
    %784 = vmatpush1.msra.mxu0 0.0
    %785 = vmatprep.subr.mxu0 0.0
    %786 = vmatpush1.msra.mxu0 0.0
    %787 = vmatprep.subr.mxu0 0.0
    %788 = vmatpush1.msra.mxu0 0.0
    %789 = vmatprep.subr.mxu0 0.0
    %790 = vmatpush1.msra.mxu0 0.0
    %791 = vmatprep.subr.mxu0 0.0
    %792 = vmatpush1.msra.mxu0 0.0
    %793 = vmatprep.subr.mxu0 0.0
    %794 = vmatpush1.msra.mxu0 0.0
    %795 = vmatprep.subr.mxu0 0.0
    %796 = vmatpush1.msra.mxu0 0.0
    %797 = vmatprep.subr.mxu0 0.0
    %798 = vmatpush1.msra.mxu0 0.0
    %799 = vmatprep.mubr.f32.mxu0 0.0
    %800 = vmatmul.mubr.f32.gmra.mrb[0].mxu0 %v711
    %v801 = vpop.f32.mrb[0].mxu0
    %v802 = vadd.f32 %v733, %v801
    %v803 = vpop.f32.mrb[0].mxu0
    %804 = vdwg.mxu0
    %805 = vst [vmem:[#allocation10] sm:$0xff] %v802
    // Predicated region
    $region54: #{tpu_custom_call.1} parent=1 // pred_check
      _
    $region55: #{tpu_custom_call.1} parent=1 // pred_check_branch
      %807 = sbr.rel (0) target = $region57
    $region56: #{tpu_custom_call.1} parent=1 // pred_region
      %s809 = ssub.s32 128, 128
      %810 = vsyncadd [#allocation4], %s809
      %s812 = sshll.u32 [#allocation10], 4
      %s813 = int_to_ptr.vmem [resolvable:$true] %s812
      %815 = dma.vmem_to_hbm [thread:$0]  %s813, 128, %s9, [#allocation4]
    $region57: #{tpu_custom_call.1} parent=1 // pred_fallthru
      _
    // Predicated region
    $region58: #{tpu_custom_call.1} parent=1 // pred_check
      _
    $region59: #{tpu_custom_call.1} parent=1 // pred_check_branch
      %817 = sbr.rel (0) target = $region61
    $region60: #{tpu_custom_call.1} parent=1 // pred_region
      %818 = dma.done [#allocation4], 128
    $region61: #{tpu_custom_call.1} parent=1 // pred_fallthru
      _
    %819 = vsyncpa [#allocation3], 1
    %820 = vsyncpa [#allocation6], 1
    %821 = vsyncpa [#allocation9], 1
    %822 = vsyncpa [#allocation4], 1

</llo_original>
